<compile_context>
chip_gen: v7x
topology: tpu7x:2x2x1
jax: 0.10.0
libtpu: 0.0.40
codegen_flags: <defaults>
</compile_context>

<pallas_src>
import functools

import jax
import jax.numpy as jnp
from jax.experimental import pallas as pl
from jax.experimental.pallas import tpu as pltpu


def _erf(x):
    """erf from elementary ops (Abramowitz & Stegun 7.1.26, |abs err| < 1.5e-7).

    exp and the (approx) reciprocal run on the EUP; only the polynomial hits
    the VPU.
    """
    a1, a2, a3, a4, a5 = (0.254829592, -0.284496736, 1.421413741,
                          -1.453152027, 1.061405429)
    p = 0.3275911
    ax = jnp.abs(x)
    t = pl.reciprocal(1.0 + p * ax, approx=True)          # EUP slot, ~free
    poly = ((((a5 * t + a4) * t + a3) * t + a2) * t + a1) * t
    y = 1.0 - poly * jnp.exp(-ax * ax)
    return jnp.where(x < 0.0, -y, y)


def _gelu_exact(x):
    """torch.nn.GELU() default (erf-based) GELU, f32 math."""
    inv_sqrt2 = 0.7071067811865476
    return 0.5 * x * (1.0 + _erf(x * inv_sqrt2))


def _ffn_kernel(x_ref, w1_ref, b1_ref, w2_ref, b2_ref, o_ref, acc_ref):
    # Grid: (row tiles [parallel], hidden slabs [arbitrary / reduction]).
    # x_ref:  (TM, DIM)   row tile (compute dtype, e.g. bf16)
    # w1_ref: (DIM, TH)   hidden slab of W1 (pre-transposed), b1_ref: (1, TH) f32
    # w2_ref: (TH, DIM)   hidden slab of W2 (pre-transposed), b2_ref: (1, DIM) f32
    # acc_ref:(TM, DIM)   f32 accumulator scratch
    j = pl.program_id(1)

    @pl.when(j == 0)
    def _init():
        acc_ref[...] = jnp.zeros_like(acc_ref)

    # First projection slab (MXU, f32 accumulation) + bias, then exact GELU in f32.
    h = jnp.dot(x_ref[...], w1_ref[...], preferred_element_type=jnp.float32)
    h = _gelu_exact(h + b1_ref[...])
    # Dropout(p) in eval mode == identity.
    # Second projection slab, accumulated into the resident f32 scratch.
    acc_ref[...] += jnp.dot(h.astype(w2_ref.dtype), w2_ref[...],
                            preferred_element_type=jnp.float32)

    @pl.when(j == pl.num_programs(1) - 1)
    def _finalize():
        o_ref[...] = (acc_ref[...] + b2_ref[...]).astype(o_ref.dtype)


def _round_up(a, b):
    return ((a + b - 1) // b) * b


def _pick_row_tile(m, block_rows):
    """Row tile: multiple of 8, <= block_rows, and >= 2 row tiles when possible
    so both v7x TensorCores get work (neutral on v5e/v6e)."""
    if m <= 8:
        return m                       # block == full dim, satisfies (8,128) rule
    return max(8, min(block_rows, _round_up(pl.cdiv(m, 2), 8)))


def _pick_hidden_tile(hidden, hidden_block):
    """Hidden slab: must divide HIDDEN exactly (reduction axis — no OOB allowed)
    and be a multiple of 128 so W1's last block dim is lane-aligned."""
    if hidden <= hidden_block:
        return hidden
    for cand in (hidden_block, 512, 384, 256, 128):
        if cand <= hidden and hidden % cand == 0 and cand % 128 == 0:
            return cand
    return hidden   # TODO(synk): odd HIDDEN falls back to fully-resident slab.


def feedforward_forward(x, w1, b1, w2, b2, *, block_rows=256, hidden_block=512,
                        compute_dtype=jnp.bfloat16):
    """FeedForward: x (..., DIM) -> (..., DIM).

    w1: (DIM, HIDDEN), b1: (HIDDEN,), w2: (HIDDEN, DIM), b2: (DIM,).
    Weights are stored pre-transposed, i.e. y = x @ W (== torch's x @ W_t.T).
    Matmuls run in `compute_dtype` (bf16 by default) with f32 accumulation;
    biases and GELU stay f32.
    """
    *lead, dim = x.shape
    hidden = w1.shape[1]
    m = 1
    for d in lead:
        m *= d

    tm = _pick_row_tile(m, block_rows)
    th = _pick_hidden_tile(hidden, hidden_block)
    grid = (pl.cdiv(m, tm), pl.cdiv(hidden, th))

    x2 = x.reshape(m, dim).astype(compute_dtype)
    w1c = w1.astype(compute_dtype)
    w2c = w2.astype(compute_dtype)
    b1_2d = b1.reshape(1, hidden).astype(jnp.float32)
    b2_2d = b2.reshape(1, dim).astype(jnp.float32)

    itemsize = jnp.dtype(compute_dtype).itemsize
    cost = pl.CostEstimate(
        flops=4 * m * dim * hidden,                     # 2 matmuls x 2*M*DIM*H
        transcendentals=2 * m * hidden,                 # exp + recip per element
        bytes_accessed=(x2.size + w1c.size + w2c.size) * itemsize
                       + (b1_2d.size + b2_2d.size) * 4
                       + m * dim * jnp.dtype(x.dtype).itemsize,
    )

    out = pl.pallas_call(
        _ffn_kernel,
        out_shape=jax.ShapeDtypeStruct((m, dim), x.dtype),
        grid=grid,
        in_specs=[
            pl.BlockSpec((tm, dim), lambda i, j: (i, 0)),      # x row tile
            pl.BlockSpec((dim, th), lambda i, j: (0, j)),      # W1 hidden slab
            pl.BlockSpec((1, th), lambda i, j: (0, j)),        # b1 hidden slab
            pl.BlockSpec((th, dim), lambda i, j: (j, 0)),      # W2 hidden slab
            pl.BlockSpec((1, dim), lambda i, j: (0, 0)),       # b2 (constant)
        ],
        out_specs=pl.BlockSpec((tm, dim), lambda i, j: (i, 0)),
        scratch_shapes=[pltpu.VMEM((tm, dim), jnp.float32)],   # f32 accumulator
        compiler_params=pltpu.CompilerParams(
            # Row axis independent (megacore-shardable); hidden axis carries
            # the accumulator => arbitrary.
            dimension_semantics=("parallel", "arbitrary"),
            # Above the 16/32 MiB default scoped limits, below v7x's 64 MiB.
            vmem_limit_bytes=48 * 1024 * 1024,
        ),
        cost_estimate=cost,
    )(x2, w1c, b1_2d, w2c, b2_2d)

    return out.reshape(*lead, dim)


def feedforward_reference(x, w1, b1, w2, b2):
    """Pure-JAX reference mirroring the PyTorch forward (exact GELU, eval dropout)."""
    h = jax.nn.gelu(x @ w1 + b1, approximate=False)
    return h @ w2 + b2


if __name__ == "__main__":
    # Small shapes consistent with the module: x (batch, seq, dim), hidden_dim.
    B, N, DIM, HIDDEN = 2, 8, 32, 64

    key = jax.random.PRNGKey(0)
    k_x, k_w1, k_b1, k_w2, k_b2 = jax.random.split(key, 5)

    x = jax.random.normal(k_x, (B, N, DIM), dtype=jnp.float32)
    w1 = jax.random.normal(k_w1, (DIM, HIDDEN), dtype=jnp.float32) * 0.05
    b1 = jax.random.normal(k_b1, (HIDDEN,), dtype=jnp.float32) * 0.05
    w2 = jax.random.normal(k_w2, (HIDDEN, DIM), dtype=jnp.float32) * 0.05
    b2 = jax.random.normal(k_b2, (DIM,), dtype=jnp.float32) * 0.05

    ref = feedforward_reference(x, w1, b1, w2, b2)

    # f32 MXU path: tight check of the kernel structure (erf approx + EUP recip
    # keep it to ~1e-4 of the exact-GELU reference).
    out_f32 = feedforward_forward(x, w1, b1, w2, b2, compute_dtype=jnp.float32)
    out_f32 = jax.block_until_ready(out_f32)
    assert out_f32.shape == (B, N, DIM)
    assert jnp.allclose(out_f32, ref, atol=1e-3, rtol=1e-3), \
        "Pallas kernel (f32 path) mismatch vs reference"

    # bf16 MXU path (production default): looser tolerance for bf16 matmul rounding.
    out_bf16 = feedforward_forward(x, w1, b1, w2, b2)
    out_bf16 = jax.block_until_ready(out_bf16)
    assert out_bf16.shape == (B, N, DIM)
    assert jnp.allclose(out_bf16, ref, atol=3e-2, rtol=3e-2), \
        "Pallas kernel (bf16 path) mismatch vs reference"

    print("KERNEL_OK")
</pallas_src>

<mosaic_0001>
module attributes {stable_mosaic.version = 11 : i64} {
  func.func @_ffn_kernel(%arg0: i32, %arg1: i32, %arg2: memref<8x32xf32, #tpu.memory_space<vmem>>, %arg3: memref<32x64xf32, #tpu.memory_space<vmem>>, %arg4: memref<1x64xf32, #tpu.memory_space<vmem>>, %arg5: memref<64x32xf32, #tpu.memory_space<vmem>>, %arg6: memref<1x32xf32, #tpu.memory_space<vmem>>, %arg7: memref<8x32xf32, #tpu.memory_space<vmem>>, %arg8: memref<8x32xf32, #tpu.memory_space<vmem>>) attributes {dimension_semantics = [#tpu.dimension_semantics<parallel>, #tpu.dimension_semantics<arbitrary>], iteration_bounds = array<i64: 2, 1>, scalar_prefetch = 0 : i64, scratch_operands = 1 : i64, tpu.core_type = #tpu.core_type<tc>, window_params = [{transform_indices = @transform_0, window_bounds = array<i64: 8, 32>}, {transform_indices = @transform_1, window_bounds = array<i64: 32, 64>}, {transform_indices = @transform_2, window_bounds = array<i64: 1, 64>}, {transform_indices = @transform_3, window_bounds = array<i64: 64, 32>}, {pipeline_mode = #tpu.pipeline_mode<synchronous>, transform_indices = @transform_4, window_bounds = array<i64: 1, 32>}, {transform_indices = @transform_5, window_bounds = array<i64: 8, 32>}]} {
    %c0_i32 = arith.constant 0 : i32
    %0 = arith.cmpi eq, %arg1, %c0_i32 : i32
    %1 = arith.extui %0 : i1 to i32
    %c0_i32_0 = arith.constant 0 : i32
    %2 = arith.cmpi ne, %1, %c0_i32_0 : i32
    scf.if %2 {
      %cst_29 = arith.constant 0.000000e+00 : f32
      %56 = vector.broadcast %cst_29 : f32 to vector<8x32xf32>
      %c0_30 = arith.constant 0 : index
      %c0_31 = arith.constant 0 : index
      %57 = vector.load %arg8[%c0_30, %c0_31] : memref<8x32xf32, #tpu.memory_space<vmem>>, vector<8x32xf32>
      tpu.vector_store %arg8[%c0_30, %c0_31], %56 {strides = array<i32>} : memref<8x32xf32, #tpu.memory_space<vmem>>, vector<8x32xf32>,
    } else {
    }
    %c0 = arith.constant 0 : index
    %c0_1 = arith.constant 0 : index
    %3 = vector.load %arg2[%c0, %c0_1] : memref<8x32xf32, #tpu.memory_space<vmem>>, vector<8x32xf32>
    %c0_2 = arith.constant 0 : index
    %c0_3 = arith.constant 0 : index
    %4 = vector.load %arg3[%c0_2, %c0_3] : memref<32x64xf32, #tpu.memory_space<vmem>>, vector<32x64xf32>
    %cst = arith.constant dense<0.000000e+00> : vector<8x64xf32>
    %5 = tpu.matmul %3, %4, %cst {dimension_numbers = #tpu.dot_dimension_numbers<[1], [0], [0], [1], [0, 0, 1, 1], [], []>} : vector<8x32xf32>, vector<32x64xf32>, vector<8x64xf32> -> vector<8x64xf32>
    %c0_4 = arith.constant 0 : index
    %c0_5 = arith.constant 0 : index
    %6 = vector.load %arg4[%c0_4, %c0_5] : memref<1x64xf32, #tpu.memory_space<vmem>>, vector<1x64xf32>
    %7 = vector.broadcast %6 : vector<1x64xf32> to vector<8x64xf32>
    %8 = arith.addf %5, %7 : vector<8x64xf32>
    %cst_6 = arith.constant 5.000000e-01 : f32
    %9 = vector.broadcast %cst_6 : f32 to vector<8x64xf32>
    %10 = arith.mulf %9, %8 : vector<8x64xf32>
    %cst_7 = arith.constant 0.707106769 : f32
    %11 = vector.broadcast %cst_7 : f32 to vector<8x64xf32>
    %12 = arith.mulf %8, %11 : vector<8x64xf32>
    %13 = math.absf %12 : vector<8x64xf32>
    %cst_8 = arith.constant 0.327591091 : f32
    %14 = vector.broadcast %cst_8 : f32 to vector<8x64xf32>
    %15 = arith.mulf %14, %13 : vector<8x64xf32>
    %cst_9 = arith.constant 1.000000e+00 : f32
    %16 = vector.broadcast %cst_9 : f32 to vector<8x64xf32>
    %17 = arith.addf %16, %15 : vector<8x64xf32>
    %18 = tpu.reciprocal %17 {approx = true} : vector<8x64xf32> -> vector<8x64xf32>
    %cst_10 = arith.constant 1.06140542 : f32
    %19 = vector.broadcast %cst_10 : f32 to vector<8x64xf32>
    %20 = arith.mulf %19, %18 : vector<8x64xf32>
    %cst_11 = arith.constant -1.45315206 : f32
    %21 = vector.broadcast %cst_11 : f32 to vector<8x64xf32>
    %22 = arith.addf %20, %21 : vector<8x64xf32>
    %23 = arith.mulf %22, %18 : vector<8x64xf32>
    %cst_12 = arith.constant 1.42141378 : f32
    %24 = vector.broadcast %cst_12 : f32 to vector<8x64xf32>
    %25 = arith.addf %23, %24 : vector<8x64xf32>
    %26 = arith.mulf %25, %18 : vector<8x64xf32>
    %cst_13 = arith.constant -0.284496725 : f32
    %27 = vector.broadcast %cst_13 : f32 to vector<8x64xf32>
    %28 = arith.addf %26, %27 : vector<8x64xf32>
    %29 = arith.mulf %28, %18 : vector<8x64xf32>
    %cst_14 = arith.constant 0.254829586 : f32
    %30 = vector.broadcast %cst_14 : f32 to vector<8x64xf32>
    %31 = arith.addf %29, %30 : vector<8x64xf32>
    %32 = arith.mulf %31, %18 : vector<8x64xf32>
    %cst_15 = arith.constant 0.000000e+00 : f32
    %33 = vector.broadcast %cst_15 : f32 to vector<8x64xf32>
    %34 = arith.subf %33, %13 : vector<8x64xf32>
    %35 = arith.mulf %34, %13 : vector<8x64xf32>
    %36 = math.exp %35 : vector<8x64xf32>
    %37 = arith.mulf %32, %36 : vector<8x64xf32>
    %cst_16 = arith.constant 1.000000e+00 : f32
    %38 = vector.broadcast %cst_16 : f32 to vector<8x64xf32>
    %39 = arith.subf %38, %37 : vector<8x64xf32>
    %cst_17 = arith.constant 0.000000e+00 : f32
    %40 = vector.broadcast %cst_17 : f32 to vector<8x64xf32>
    %41 = arith.cmpf olt, %12, %40 : vector<8x64xf32>
    %cst_18 = arith.constant 0.000000e+00 : f32
    %42 = vector.broadcast %cst_18 : f32 to vector<8x64xf32>
    %43 = arith.subf %42, %39 : vector<8x64xf32>
    %44 = arith.select %41, %43, %39 : vector<8x64xi1>, vector<8x64xf32>
    %cst_19 = arith.constant 1.000000e+00 : f32
    %45 = vector.broadcast %cst_19 : f32 to vector<8x64xf32>
    %46 = arith.addf %45, %44 : vector<8x64xf32>
    %47 = arith.mulf %10, %46 : vector<8x64xf32>
    %c0_20 = arith.constant 0 : index
    %c0_21 = arith.constant 0 : index
    %48 = vector.load %arg8[%c0_20, %c0_21] : memref<8x32xf32, #tpu.memory_space<vmem>>, vector<8x32xf32>
    %c0_22 = arith.constant 0 : index
    %c0_23 = arith.constant 0 : index
    %49 = vector.load %arg5[%c0_22, %c0_23] : memref<64x32xf32, #tpu.memory_space<vmem>>, vector<64x32xf32>
    %cst_24 = arith.constant dense<0.000000e+00> : vector<8x32xf32>
    %50 = tpu.matmul %47, %49, %cst_24 {dimension_numbers = #tpu.dot_dimension_numbers<[1], [0], [0], [1], [0, 0, 1, 1], [], []>} : vector<8x64xf32>, vector<64x32xf32>, vector<8x32xf32> -> vector<8x32xf32>
    %51 = arith.addf %48, %50 : vector<8x32xf32>
    %c0_25 = arith.constant 0 : index
    %c0_26 = arith.constant 0 : index
    %52 = vector.load %arg8[%c0_25, %c0_26] : memref<8x32xf32, #tpu.memory_space<vmem>>, vector<8x32xf32>
    tpu.vector_store %arg8[%c0_25, %c0_26], %51 {strides = array<i32>} : memref<8x32xf32, #tpu.memory_space<vmem>>, vector<8x32xf32>,
    %c0_i32_27 = arith.constant 0 : i32
    %53 = arith.cmpi eq, %arg1, %c0_i32_27 : i32
    %54 = arith.extui %53 : i1 to i32
    %c0_i32_28 = arith.constant 0 : i32
    %55 = arith.cmpi ne, %54, %c0_i32_28 : i32
    scf.if %55 {
      %c0_29 = arith.constant 0 : index
      %c0_30 = arith.constant 0 : index
      %56 = vector.load %arg8[%c0_29, %c0_30] : memref<8x32xf32, #tpu.memory_space<vmem>>, vector<8x32xf32>
      %c0_31 = arith.constant 0 : index
      %c0_32 = arith.constant 0 : index
      %57 = vector.load %arg6[%c0_31, %c0_32] : memref<1x32xf32, #tpu.memory_space<vmem>>, vector<1x32xf32>
      %58 = vector.broadcast %57 : vector<1x32xf32> to vector<8x32xf32>
      %59 = arith.addf %56, %58 : vector<8x32xf32>
      %c0_33 = arith.constant 0 : index
      %c0_34 = arith.constant 0 : index
      %60 = vector.load %arg7[%c0_33, %c0_34] : memref<8x32xf32, #tpu.memory_space<vmem>>, vector<8x32xf32>
      tpu.vector_store %arg7[%c0_33, %c0_34], %59 {strides = array<i32>} : memref<8x32xf32, #tpu.memory_space<vmem>>, vector<8x32xf32>,
    } else {
    }
    return
  }
  func.func @transform_0(%arg0: i32, %arg1: i32) -> (i32, i32) {
    %c0_i32 = arith.constant 0 : i32
    %c0_i32_0 = arith.constant 0 : i32
    return %arg0, %c0_i32 : i32, i32
  }
  func.func @transform_1(%arg0: i32, %arg1: i32) -> (i32, i32) {
    %c0_i32 = arith.constant 0 : i32
    %c0_i32_0 = arith.constant 0 : i32
    return %c0_i32, %arg1 : i32, i32
  }
  func.func @transform_2(%arg0: i32, %arg1: i32) -> (i32, i32) {
    %c0_i32 = arith.constant 0 : i32
    %c0_i32_0 = arith.constant 0 : i32
    return %c0_i32, %arg1 : i32, i32
  }
  func.func @transform_3(%arg0: i32, %arg1: i32) -> (i32, i32) {
    %c0_i32 = arith.constant 0 : i32
    %c0_i32_0 = arith.constant 0 : i32
    return %arg1, %c0_i32 : i32, i32
  }
  func.func @transform_4(%arg0: i32, %arg1: i32) -> (i32, i32) {
    %c0_i32 = arith.constant 0 : i32
    %c0_i32_0 = arith.constant 0 : i32
    %c0_i32_1 = arith.constant 0 : i32
    return %c0_i32, %c0_i32_0 : i32, i32
  }
  func.func @transform_5(%arg0: i32, %arg1: i32) -> (i32, i32) {
    %c0_i32 = arith.constant 0 : i32
    %c0_i32_0 = arith.constant 0 : i32
    return %arg0, %c0_i32 : i32, i32
  }
}

</mosaic_0001>

<llo_original>
// kernel: tpu_custom_call.1
$region0: #{tpu_custom_call.1}
  #allocation0 [shape = 'u32[]', space=smem, size = 0x4, offset = 0x4, fixed_abs, tag = 'smem constant byte address 0x4 - core index']
  #allocation1 [shape = 'u32[144,128]{1,0:T(1,128)}', space=vmem, size = 0x12000, scoped, tag = 'internal scratch']
  #allocation2 [shape = 'f32[8,32]{1,0:T(8,128)}', space=vmem, size = 0x1000, scoped, tag = 'scratch operand']
  %s0 = inlined_call_operand.vmem [shape: f32[16,32], index: 0, kind: input, shape index: {}]
  %s1 = inlined_call_operand.vmem [shape: f32[32,64], index: 1, kind: input, shape index: {}]
  %s2 = inlined_call_operand.vmem [shape: f32[1,64], index: 2, kind: input, shape index: {}]
  %s3 = inlined_call_operand.vmem [shape: f32[64,32], index: 3, kind: input, shape index: {}]
  %s4 = inlined_call_operand.vmem [shape: f32[1,32], index: 4, kind: input, shape index: {}]
  %s5 = inlined_call_operand.hbm [shape: f32[16,32], index: 5, kind: output, shape index: {}]
  %s6 = sld [smem:[#allocation0]]
  $region61: #{tpu_custom_call.1} parent=0
    _
  %s8 = ssub.s32 1, %s6
  %s9 = scalar_select 0, %s8, %s6
  $region1: #{tpu_custom_call.1} parent=0
    #allocation3 [shape = 'u8[8192]{0}', space=vmem, size = 0x2000, scoped, tag = 'output window, operand 0']
    #allocation4 [shape = 's32[2]{0}', space=sflag, size = 0x8, scoped, tag = 'scoped memory for tpu_custom_call.1']
    %10 = vsyncpa [#allocation4], 0
    %s11 = scalar_lea.sflag [#allocation4], 1
    %12 = vsyncpa %s11, 0
    loop: start=0, step=1, limit=4
    $region2: #{tpu_custom_call.1} parent=1 // loop_pre_header
      _
    $region3: #{tpu_custom_call.1} parent=1 // loop_header
      %s14 = sphi 0, %s18
      %p15 = scmp.ge.s32.totalorder %s14, 4
      %s21 = sphi 0, %s33
      %s22 = sphi 0, %s29
      %s23 = sphi 0, %s21
      %s24 = sphi 0, %s22
      %s25 = sphi 0, %s23
      %s26 = sphi 0, %s24
      %s36 = sphi 0, %s38
      %s39 = sphi 0, %s36
      %s40 = sphi 0, %s39
      %s56 = sphi 0, %s40
      %s62 = sphi 0, %s64
      %s65 = sphi 0, %s62
      %s66 = sphi 0, %s65
      %s82 = sphi 0, %s66
      %s88 = sphi 0, %s90
      %s91 = sphi 0, %s88
      %s92 = sphi 0, %s91
      %s108 = sphi 0, %s92
      %s114 = sphi 0, %s116
      %s117 = sphi 0, %s114
      %s118 = sphi 0, %s117
      %s134 = sphi 0, %s118
      %s138 = sphi 0, %s138
      %s140 = sphi 0, %s138
      %s141 = sphi 0, %s140
      %s155 = sphi 0, %s141
      %s161 = sphi 0, %s163
      %s164 = sphi 0, %s161
      %s165 = sphi 0, %s164
      %s181 = sphi 0, %s165
    $region4: #{tpu_custom_call.1} parent=1 // loop_header_branch
      %17 = sbr.rel (%p15) target = $region8
    $region5: #{tpu_custom_call.1} parent=1 // loop_body
      %s19 = ssub.s32 %s14, 1
      %s20 = ssub.s32 %s14, 2
      %s27 = sadd.s32 1, %s22
      %p28 = scmp.ge.s32.totalorder %s27, 1
      %s29 = scalar_select %p28, 0, %s27
      %s30 = sadd.s32 1, %s21
      %s31 = scalar_select %p28, %s30, %s21
      %p32 = scmp.ge.s32.totalorder %s31, 2
      %s33 = scalar_select %p32, 0, %s31
      %s34 = ssub.s32 %s21, %s33
      %p35 = scmp.eq.s32.totalorder %s34, 0
      %s37 = sadd.s32 %s36, 1
      %s38 = scalar_select %p35, %s36, %s37
      %p41 = pneg %p35
      %p42 = scmp.eq.s32.totalorder %s14, 1
      %p43 = por %p41, %p42
      %p44 = scmp.ne.s32.totalorder %s36, %s39
      %p45 = scmp.eq.s32.totalorder %s14, 0
      %p46 = por %p44, %p45
      %p47 = scmp.ne.s32.totalorder %s36, %s39
      %p48 = scmp.eq.s32.totalorder %s19, 1
      %p49 = por %p47, %p48
      %p50 = scmp.ne.s32.totalorder %s39, %s40
      %p51 = scmp.eq.s32.totalorder %s19, 0
      %p52 = por %p50, %p51
      %p53 = scmp.ne.s32.totalorder %s39, %s40
      %p54 = scmp.eq.s32.totalorder %s20, 1
      %p55 = por %p53, %p54
      %p57 = scmp.ne.s32.totalorder %s40, %s56
      %p58 = scmp.eq.s32.totalorder %s20, 0
      %p59 = por %p57, %p58
      %s60 = ssub.s32 %s22, %s29
      %p61 = scmp.eq.s32.totalorder %s60, 0
      %s63 = sadd.s32 %s62, 1
      %s64 = scalar_select %p61, %s62, %s63
      %p67 = pneg %p61
      %p68 = scmp.eq.s32.totalorder %s14, 1
      %p69 = por %p67, %p68
      %p70 = scmp.ne.s32.totalorder %s62, %s65
      %p71 = scmp.eq.s32.totalorder %s14, 0
      %p72 = por %p70, %p71
      %p73 = scmp.ne.s32.totalorder %s62, %s65
      %p74 = scmp.eq.s32.totalorder %s19, 1
      %p75 = por %p73, %p74
      %p76 = scmp.ne.s32.totalorder %s65, %s66
      %p77 = scmp.eq.s32.totalorder %s19, 0
      %p78 = por %p76, %p77
      %p79 = scmp.ne.s32.totalorder %s65, %s66
      %p80 = scmp.eq.s32.totalorder %s20, 1
      %p81 = por %p79, %p80
      %p83 = scmp.ne.s32.totalorder %s66, %s82
      %p84 = scmp.eq.s32.totalorder %s20, 0
      %p85 = por %p83, %p84
      %s86 = ssub.s32 %s22, %s29
      %p87 = scmp.eq.s32.totalorder %s86, 0
      %s89 = sadd.s32 %s88, 1
      %s90 = scalar_select %p87, %s88, %s89
      %p93 = pneg %p87
      %p94 = scmp.eq.s32.totalorder %s14, 1
      %p95 = por %p93, %p94
      %p96 = scmp.ne.s32.totalorder %s88, %s91
      %p97 = scmp.eq.s32.totalorder %s14, 0
      %p98 = por %p96, %p97
      %p99 = scmp.ne.s32.totalorder %s88, %s91
      %p100 = scmp.eq.s32.totalorder %s19, 1
      %p101 = por %p99, %p100
      %p102 = scmp.ne.s32.totalorder %s91, %s92
      %p103 = scmp.eq.s32.totalorder %s19, 0
      %p104 = por %p102, %p103
      %p105 = scmp.ne.s32.totalorder %s91, %s92
      %p106 = scmp.eq.s32.totalorder %s20, 1
      %p107 = por %p105, %p106
      %p109 = scmp.ne.s32.totalorder %s92, %s108
      %p110 = scmp.eq.s32.totalorder %s20, 0
      %p111 = por %p109, %p110
      %s112 = ssub.s32 %s22, %s29
      %p113 = scmp.eq.s32.totalorder %s112, 0
      %s115 = sadd.s32 %s114, 1
      %s116 = scalar_select %p113, %s114, %s115
      %p119 = pneg %p113
      %p120 = scmp.eq.s32.totalorder %s14, 1
      %p121 = por %p119, %p120
      %p122 = scmp.ne.s32.totalorder %s114, %s117
      %p123 = scmp.eq.s32.totalorder %s14, 0
      %p124 = por %p122, %p123
      %p125 = scmp.ne.s32.totalorder %s114, %s117
      %p126 = scmp.eq.s32.totalorder %s19, 1
      %p127 = por %p125, %p126
      %p128 = scmp.ne.s32.totalorder %s117, %s118
      %p129 = scmp.eq.s32.totalorder %s19, 0
      %p130 = por %p128, %p129
      %p131 = scmp.ne.s32.totalorder %s117, %s118
      %p132 = scmp.eq.s32.totalorder %s20, 1
      %p133 = por %p131, %p132
      %p135 = scmp.ne.s32.totalorder %s118, %s134
      %p136 = scmp.eq.s32.totalorder %s20, 0
      %p137 = por %p135, %p136
      %s139 = sadd.s32 %s138, 1
      %p142 = scmp.eq.s32.totalorder %s14, 1
      %p143 = scmp.ne.s32.totalorder %s138, %s140
      %p144 = scmp.eq.s32.totalorder %s14, 0
      %p145 = por %p143, %p144
      %p146 = scmp.ne.s32.totalorder %s138, %s140
      %p147 = scmp.eq.s32.totalorder %s19, 1
      %p148 = por %p146, %p147
      %p149 = scmp.ne.s32.totalorder %s140, %s141
      %p150 = scmp.eq.s32.totalorder %s19, 0
      %p151 = por %p149, %p150
      %p152 = scmp.ne.s32.totalorder %s140, %s141
      %p153 = scmp.eq.s32.totalorder %s20, 1
      %p154 = por %p152, %p153
      %p156 = scmp.ne.s32.totalorder %s141, %s155
      %p157 = scmp.eq.s32.totalorder %s20, 0
      %p158 = por %p156, %p157
      %s159 = ssub.s32 %s21, %s33
      %p160 = scmp.eq.s32.totalorder %s159, 0
      %s162 = sadd.s32 %s161, 1
      %s163 = scalar_select %p160, %s161, %s162
      %p166 = pneg %p160
      %p167 = scmp.eq.s32.totalorder %s14, 1
      %p168 = por %p166, %p167
      %p169 = scmp.ne.s32.totalorder %s161, %s164
      %p170 = scmp.eq.s32.totalorder %s14, 0
      %p171 = por %p169, %p170
      %p172 = scmp.ne.s32.totalorder %s161, %s164
      %p173 = scmp.eq.s32.totalorder %s19, 1
      %p174 = por %p172, %p173
      %p175 = scmp.ne.s32.totalorder %s164, %s165
      %p176 = scmp.eq.s32.totalorder %s19, 0
      %p177 = por %p175, %p176
      %p178 = scmp.ne.s32.totalorder %s164, %s165
      %p179 = scmp.eq.s32.totalorder %s20, 1
      %p180 = por %p178, %p179
      %p182 = scmp.ne.s32.totalorder %s165, %s181
      %p183 = scmp.eq.s32.totalorder %s20, 0
      %p184 = por %p182, %p183
      %p185 = scmp.le.s32.totalorder 1, %s14
      %p186 = scmp.lt.s32.totalorder %s14, 3
      %p187 = pnand %p185, %p186
      %p188 = pneg %p187
      // Predicated region
      $region9: #{tpu_custom_call.1} parent=5 // pred_check
        _
      $region10: #{tpu_custom_call.1} parent=5 // pred_check_branch
        %190 = sbr.rel (%p187) target = $region12
      $region11: #{tpu_custom_call.1} parent=5 // pred_region
        %s191 = ssub.s32 %s14, 1
        // Predicated region
        $region13: #{tpu_custom_call.1} parent=11 // pred_check
          %p192 = pneg %p78
        $region14: #{tpu_custom_call.1} parent=11 // pred_check_branch
          %194 = sbr.rel (%p192) target = $region16
        $region15: #{tpu_custom_call.1} parent=11 // pred_region
          %p195 = scmp.lt.s32.totalorder %s24, 0
          %s196 = scalar_select %p195, %s24, 0
          %s197 = smul.addr %s196, 8
          %s198 = scalar_lea.vmem %s1, %s197
        $region16: #{tpu_custom_call.1} parent=11 // pred_fallthru
          _
        // Predicated region
        $region17: #{tpu_custom_call.1} parent=11 // pred_check
          %p199 = pneg %p104
        $region18: #{tpu_custom_call.1} parent=11 // pred_check_branch
          %201 = sbr.rel (%p199) target = $region20
        $region19: #{tpu_custom_call.1} parent=11 // pred_region
          %p202 = scmp.lt.s32.totalorder %s24, 0
          %s203 = scalar_select %p202, %s24, 0
          %s204 = scalar_lea.vmem %s2, %s203
        $region20: #{tpu_custom_call.1} parent=11 // pred_fallthru
          _
        // Predicated region
        $region21: #{tpu_custom_call.1} parent=11 // pred_check
          %p205 = pneg %p130
        $region22: #{tpu_custom_call.1} parent=11 // pred_check_branch
          %207 = sbr.rel (%p205) target = $region24
        $region23: #{tpu_custom_call.1} parent=11 // pred_region
          %s208 = smul.u32 8, %s24
          %p209 = scmp.lt.s32.totalorder %s208, 7
          %s210 = scalar_select %p209, %s208, 7
          %s211 = smul.addr %s210, 8
          %s212 = scalar_lea.vmem %s3, %s211
          %s213 = smul.u32 8, %s24
        $region24: #{tpu_custom_call.1} parent=11 // pred_fallthru
          _
        // Predicated region
        $region25: #{tpu_custom_call.1} parent=11 // pred_check
          %p214 = pneg %p151
        $region26: #{tpu_custom_call.1} parent=11 // pred_check_branch
          %216 = sbr.rel (%p214) target = $region28
        $region27: #{tpu_custom_call.1} parent=11 // pred_region
          _
        $region28: #{tpu_custom_call.1} parent=11 // pred_fallthru
          _
      $region12: #{tpu_custom_call.1} parent=5 // pred_fallthru
        _
      %p217 = scmp.lt.s32.totalorder %s14, 2
      // Predicated region
      $region29: #{tpu_custom_call.1} parent=5 // pred_check
        %p218 = pneg %p217
      $region30: #{tpu_custom_call.1} parent=5 // pred_check_branch
        %220 = sbr.rel (%p218) target = $region32
      $region31: #{tpu_custom_call.1} parent=5 // pred_region
        // Predicated region
        $region33: #{tpu_custom_call.1} parent=31 // pred_check
          %p221 = pneg %p46
        $region34: #{tpu_custom_call.1} parent=31 // pred_check_branch
          %223 = sbr.rel (%p221) target = $region36
        $region35: #{tpu_custom_call.1} parent=31 // pred_region
          %p224 = scmp.lt.s32.totalorder %s21, 1
          %s225 = scalar_select %p224, %s21, 1
          %s226 = smul.addr %s225, 8
          %s227 = scalar_lea.vmem %s0, %s226
        $region36: #{tpu_custom_call.1} parent=31 // pred_fallthru
          _
      $region32: #{tpu_custom_call.1} parent=5 // pred_fallthru
        _
      %p228 = scmp.le.s32.totalorder 1, %s14
      %p229 = scmp.lt.s32.totalorder %s14, 3
      %p230 = pnand %p228, %p229
      %p231 = pneg %p230
      // Predicated region
      $region37: #{tpu_custom_call.1} parent=5 // pred_check
        _
      $region38: #{tpu_custom_call.1} parent=5 // pred_check_branch
        %233 = sbr.rel (%p230) target = $region40
      $region39: #{tpu_custom_call.1} parent=5 // pred_region
        %s234 = ssub.s32 %s14, 1
        %p235 = scmp.lt.s32.totalorder %s23, 1
        %s236 = scalar_select %p235, %s23, 1
        %s237 = smul.addr %s236, 8
        %s238 = scalar_lea.vmem %s0, %s237
        %p239 = pneg %p52
        %p240 = pneg %p49
        %p241 = scmp.lt.s32.totalorder %s24, 0
        %s242 = scalar_select %p241, %s24, 0
        %s243 = smul.addr %s242, 8
        %s244 = scalar_lea.vmem %s1, %s243
        %p245 = pneg %p78
        %p246 = pneg %p75
        %p247 = scmp.lt.s32.totalorder %s24, 0
        %s248 = scalar_select %p247, %s24, 0
        %s249 = scalar_lea.vmem %s2, %s248
        %p250 = pneg %p104
        %p251 = pneg %p101
        %s252 = smul.u32 8, %s24
        %p253 = scmp.lt.s32.totalorder %s252, 7
        %s254 = scalar_select %p253, %s252, 7
        %s255 = smul.addr %s254, 8
        %s256 = scalar_lea.vmem %s3, %s255
        %p257 = pneg %p130
        %p258 = pneg %p127
        %p259 = pneg %p151
        %p260 = pneg %p148
        %p261 = pneg %p177
        %p262 = pneg %p174
        %s263 = sand.u32 %s164, 1
        %s264 = scalar_lea.sflag [#allocation4], %s263
        %s265 = sand.u32 %s164, 1
        %s266 = smul.addr %s265, 8
        %s267 = scalar_lea.vmem [#allocation3], %s266
        %p268 = scmp.lt.s32.totalorder %s23, 1
        %s269 = scalar_select %p268, %s23, 1
        %s270 = smul.addr %s269, 8
        %s271 = scalar_lea.vmem %s0, %s270
        %p272 = scmp.lt.s32.totalorder %s24, 0
        %s273 = scalar_select %p272, %s24, 0
        %s274 = smul.addr %s273, 8
        %s275 = scalar_lea.vmem %s1, %s274
        %p276 = scmp.lt.s32.totalorder %s24, 0
        %s277 = scalar_select %p276, %s24, 0
        %s278 = scalar_lea.vmem %s2, %s277
        %s279 = smul.u32 8, %s24
        %p280 = scmp.lt.s32.totalorder %s279, 7
        %s281 = scalar_select %p280, %s279, 7
        %s282 = smul.addr %s281, 8
        %s283 = scalar_lea.vmem %s3, %s282
        %s284 = smul.u32 8, %s24
        %p285 = scmp.eq.s32.totalorder %s24, 0
        // Predicated region
        $region41: #{tpu_custom_call.1} parent=39 // pred_check
          %p286 = pneg %p285
        $region42: #{tpu_custom_call.1} parent=39 // pred_check_branch
          %288 = sbr.rel (%p286) target = $region44
        $region43: #{tpu_custom_call.1} parent=39 // pred_region
          %vm289 = vcmask 261120
          %290 = vst.msk [vmem:[#allocation2] sm:$0xff] %vm289, 0.0
        $region44: #{tpu_custom_call.1} parent=39 // pred_fallthru
          _
        %v291 = vld [vmem:[%s271] sm:$0xff]
        %v292 = vld [vmem:[%s275] sm:$0xff]
        %v293 = vld [vmem:[%s275 + $0x8] sm:$0xff]
        %v294 = vld [vmem:[%s275 + $0x10] sm:$0xff]
        %v295 = vld [vmem:[%s275 + $0x18] sm:$0xff]
        %v296 = vld [vmem:[%s278] sm:$0x1]
        %v298 = vlaneseq
        %v299 = vshrl.u32 %v298, 7
        %v300 = vsub.s32 0, %v299
        %v301 = vrot.slane %v296, %v300
        %vm303 = vcmask 261120
        %v305 = vsel %vm303, %v291, 0
        %307 = vmatprep.subr.mxu0 0.0
        %308 = vmatpush1.msra.mxu0 %v292
        %309 = vmatprep.subr.mxu0 0.0
        %310 = vmatpush1.msra.mxu0 %v293
        %311 = vmatprep.subr.mxu0 0.0
        %312 = vmatpush1.msra.mxu0 %v294
        %313 = vmatprep.subr.mxu0 0.0
        %314 = vmatpush1.msra.mxu0 %v295
        %315 = vmatprep.subr.mxu0 0.0
        %316 = vmatpush1.msra.mxu0 0.0
        %317 = vmatprep.subr.mxu0 0.0
        %318 = vmatpush1.msra.mxu0 0.0
        %319 = vmatprep.subr.mxu0 0.0
        %320 = vmatpush1.msra.mxu0 0.0
        %321 = vmatprep.subr.mxu0 0.0
        %322 = vmatpush1.msra.mxu0 0.0
        %323 = vmatprep.subr.mxu0 0.0
        %324 = vmatpush1.msra.mxu0 0.0
        %325 = vmatprep.subr.mxu0 0.0
        %326 = vmatpush1.msra.mxu0 0.0
        %327 = vmatprep.subr.mxu0 0.0
        %328 = vmatpush1.msra.mxu0 0.0
        %329 = vmatprep.subr.mxu0 0.0
        %330 = vmatpush1.msra.mxu0 0.0
        %331 = vmatprep.subr.mxu0 0.0
        %332 = vmatpush1.msra.mxu0 0.0
        %333 = vmatprep.subr.mxu0 0.0
        %334 = vmatpush1.msra.mxu0 0.0
        %335 = vmatprep.subr.mxu0 0.0
        %336 = vmatpush1.msra.mxu0 0.0
        %337 = vmatprep.subr.mxu0 0.0
        %338 = vmatpush1.msra.mxu0 0.0
        %339 = vmatprep.subr.mxu0 0.0
        %340 = vmatpush1.msra.mxu0 0.0
        %341 = vmatprep.subr.mxu0 0.0
        %342 = vmatpush1.msra.mxu0 0.0
        %343 = vmatprep.subr.mxu0 0.0
        %344 = vmatpush1.msra.mxu0 0.0
        %345 = vmatprep.subr.mxu0 0.0
        %346 = vmatpush1.msra.mxu0 0.0
        %347 = vmatprep.subr.mxu0 0.0
        %348 = vmatpush1.msra.mxu0 0.0
        %349 = vmatprep.subr.mxu0 0.0
        %350 = vmatpush1.msra.mxu0 0.0
        %351 = vmatprep.subr.mxu0 0.0
        %352 = vmatpush1.msra.mxu0 0.0
        %353 = vmatprep.subr.mxu0 0.0
        %354 = vmatpush1.msra.mxu0 0.0
        %355 = vmatprep.subr.mxu0 0.0
        %356 = vmatpush1.msra.mxu0 0.0
        %357 = vmatprep.subr.mxu0 0.0
        %358 = vmatpush1.msra.mxu0 0.0
        %359 = vmatprep.subr.mxu0 0.0
        %360 = vmatpush1.msra.mxu0 0.0
        %361 = vmatprep.subr.mxu0 0.0
        %362 = vmatpush1.msra.mxu0 0.0
        %363 = vmatprep.subr.mxu0 0.0
        %364 = vmatpush1.msra.mxu0 0.0
        %365 = vmatprep.subr.mxu0 0.0
        %366 = vmatpush1.msra.mxu0 0.0
        %367 = vmatprep.subr.mxu0 0.0
        %368 = vmatpush1.msra.mxu0 0.0
        %369 = vmatprep.subr.mxu0 0.0
        %370 = vmatpush1.msra.mxu0 0.0
        %371 = vmatprep.mubr.f32.mxu0 0.0
        %372 = vmatmul.mubr.f32.gmra.mrb[0].mxu0 %v305
        %v373 = vpop.f32.mrb[0].mxu0
        %v374 = vadd.f32 %v301, %v373
        %v375 = vpop.f32.mrb[0].mxu0
        %376 = vdwg.mxu0
        %v377 = vmul.f32 %v374, 0.5
        %v378 = vmul.f32 %v374, 0.70710677
        %v379 = vand.u32 2147483647, %v378
        %v380 = vmul.f32 %v379, 0.3275911
        %v381 = vadd.f32 %v380, 1.0
        %v382 = vrcp.pop %v381
        %v383 = vmul.f32 %v382, 1.0614054
        %v384 = vadd.f32 %v383, -1.4531521
        %v385 = vmul.f32 %v384, %v382
        %v386 = vadd.f32 %v385, 1.4214138
        %v387 = vmul.f32 %v386, %v382
        %v388 = vadd.f32 %v387, -0.28449672
        %v389 = vmul.f32 %v388, %v382
        %v390 = vadd.f32 %v389, 0.2548296
        %v391 = vmul.f32 %v390, %v382
        %v392 = vsub.f32 0.0, %v379
        %v393 = vmul.f32 %v392, %v379
        %v394 = vmul.f32 %v393, 1.442695
        %v395 = vpow.pop %v394
        %v396 = vmul.f32 %v391, %v395
        %v397 = vsub.f32 1.0, %v396
        %vm398 = vcmp.lt.f32.partialorder %v378, 0.0
        %v399 = vsub.f32 0.0, %v397
        %v400 = vsel %vm398, %v399, %v397
        %v401 = vadd.f32 %v400, 1.0
        %v402 = vmul.f32 %v377, %v401
        %v403 = vld [vmem:[#allocation2] sm:$0xff]
        %v404 = vld [vmem:[%s283] sm:$0xff]
        %v405 = vld [vmem:[%s283 + $0x8] sm:$0xff]
        %v406 = vld [vmem:[%s283 + $0x10] sm:$0xff]
        %v407 = vld [vmem:[%s283 + $0x18] sm:$0xff]
        %v408 = vld [vmem:[%s283 + $0x20] sm:$0xff]
        %v409 = vld [vmem:[%s283 + $0x28] sm:$0xff]
        %v410 = vld [vmem:[%s283 + $0x30] sm:$0xff]
        %v411 = vld [vmem:[%s283 + $0x38] sm:$0xff]
        %vm412 = vcmask 523264
        %v414 = vsel %vm412, %v402, 0
        %416 = vmatprep.subr.mxu0 0.0
        %417 = vmatpush1.msra.mxu0 %v404
        %418 = vmatprep.subr.mxu0 0.0
        %419 = vmatpush1.msra.mxu0 %v405
        %420 = vmatprep.subr.mxu0 0.0
        %421 = vmatpush1.msra.mxu0 %v406
        %422 = vmatprep.subr.mxu0 0.0
        %423 = vmatpush1.msra.mxu0 %v407
        %424 = vmatprep.subr.mxu0 0.0
        %425 = vmatpush1.msra.mxu0 %v408
        %426 = vmatprep.subr.mxu0 0.0
        %427 = vmatpush1.msra.mxu0 %v409
        %428 = vmatprep.subr.mxu0 0.0
        %429 = vmatpush1.msra.mxu0 %v410
        %430 = vmatprep.subr.mxu0 0.0
        %431 = vmatpush1.msra.mxu0 %v411
        %432 = vmatprep.subr.mxu0 0.0
        %433 = vmatpush1.msra.mxu0 0.0
        %434 = vmatprep.subr.mxu0 0.0
        %435 = vmatpush1.msra.mxu0 0.0
        %436 = vmatprep.subr.mxu0 0.0
        %437 = vmatpush1.msra.mxu0 0.0
        %438 = vmatprep.subr.mxu0 0.0
        %439 = vmatpush1.msra.mxu0 0.0
        %440 = vmatprep.subr.mxu0 0.0
        %441 = vmatpush1.msra.mxu0 0.0
        %442 = vmatprep.subr.mxu0 0.0
        %443 = vmatpush1.msra.mxu0 0.0
        %444 = vmatprep.subr.mxu0 0.0
        %445 = vmatpush1.msra.mxu0 0.0
        %446 = vmatprep.subr.mxu0 0.0
        %447 = vmatpush1.msra.mxu0 0.0
        %448 = vmatprep.subr.mxu0 0.0
        %449 = vmatpush1.msra.mxu0 0.0
        %450 = vmatprep.subr.mxu0 0.0
        %451 = vmatpush1.msra.mxu0 0.0
        %452 = vmatprep.subr.mxu0 0.0
        %453 = vmatpush1.msra.mxu0 0.0
        %454 = vmatprep.subr.mxu0 0.0
        %455 = vmatpush1.msra.mxu0 0.0
        %456 = vmatprep.subr.mxu0 0.0
        %457 = vmatpush1.msra.mxu0 0.0
        %458 = vmatprep.subr.mxu0 0.0
        %459 = vmatpush1.msra.mxu0 0.0
        %460 = vmatprep.subr.mxu0 0.0
        %461 = vmatpush1.msra.mxu0 0.0
        %462 = vmatprep.subr.mxu0 0.0
        %463 = vmatpush1.msra.mxu0 0.0
        %464 = vmatprep.subr.mxu0 0.0
        %465 = vmatpush1.msra.mxu0 0.0
        %466 = vmatprep.subr.mxu0 0.0
        %467 = vmatpush1.msra.mxu0 0.0
        %468 = vmatprep.subr.mxu0 0.0
        %469 = vmatpush1.msra.mxu0 0.0
        %470 = vmatprep.subr.mxu0 0.0
        %471 = vmatpush1.msra.mxu0 0.0
        %472 = vmatprep.subr.mxu0 0.0
        %473 = vmatpush1.msra.mxu0 0.0
        %474 = vmatprep.subr.mxu0 0.0
        %475 = vmatpush1.msra.mxu0 0.0
        %476 = vmatprep.subr.mxu0 0.0
        %477 = vmatpush1.msra.mxu0 0.0
        %478 = vmatprep.subr.mxu0 0.0
        %479 = vmatpush1.msra.mxu0 0.0
        %480 = vmatprep.mubr.f32.mxu0 0.0
        %481 = vmatmul.mubr.f32.gmra.mrb[0].mxu0 %v414
        %v482 = vpop.f32.mrb[0].mxu0
        %v483 = vadd.f32 0.0, %v482
        %v484 = vpop.f32.mrb[0].mxu0
        %485 = vdwg.mxu0
        %v486 = vadd.f32 %v403, %v483
        %487 = vst.msk [vmem:[#allocation2] sm:$0xff] %vm303, %v486
        // Predicated region
        $region45: #{tpu_custom_call.1} parent=39 // pred_check
          %p488 = pneg %p285
        $region46: #{tpu_custom_call.1} parent=39 // pred_check_branch
          %490 = sbr.rel (%p488) target = $region48
        $region47: #{tpu_custom_call.1} parent=39 // pred_region
          %v491 = vld [vmem:[#allocation2] sm:$0xff]
          %v492 = vld [vmem:[%s4] sm:$0x1]
          %v494 = vlaneseq
          %v495 = vshrl.u32 %v494, 7
          %v496 = vsub.s32 0, %v495
          %v497 = vrot.slane %v492, %v496
          %v499 = vadd.f32 %v491, %v497
          %500 = vst.msk [vmem:[%s267] sm:$0xff] %vm303, %v499
        $region48: #{tpu_custom_call.1} parent=39 // pred_fallthru
          _
        %s501 = sand.u32 %s164, 1
        %s502 = scalar_lea.sflag [#allocation4], %s501
        %s503 = sand.u32 %s164, 1
        %s504 = smul.addr %s503, 8
        %s505 = scalar_lea.vmem [#allocation3], %s504
        // Predicated region
        $region49: #{tpu_custom_call.1} parent=39 // pred_check
          %p506 = pneg %p174
        $region50: #{tpu_custom_call.1} parent=39 // pred_check_branch
          %508 = sbr.rel (%p506) target = $region52
        $region51: #{tpu_custom_call.1} parent=39 // pred_region
          %s510 = ssub.s32 128, 128
          %511 = vsyncadd %s502, %s510
          %s512 = smul.addr %s23, 128
          %s513 = scalar_lea.hbm %s5, %s512
          %s515 = sshll.u32 %s505, 4
          %s516 = int_to_ptr.vmem [resolvable:$true] %s515
          %518 = dma.vmem_to_hbm [thread:$0]  %s516, 128, %s513, %s502
        $region52: #{tpu_custom_call.1} parent=39 // pred_fallthru
          _
      $region40: #{tpu_custom_call.1} parent=5 // pred_fallthru
        _
      %p519 = scmp.le.s32.totalorder 2, %s14
      // Predicated region
      $region53: #{tpu_custom_call.1} parent=5 // pred_check
        %p520 = pneg %p519
      $region54: #{tpu_custom_call.1} parent=5 // pred_check_branch
        %522 = sbr.rel (%p520) target = $region56
      $region55: #{tpu_custom_call.1} parent=5 // pred_region
        %s523 = ssub.s32 %s14, 2
        // Predicated region
        $region57: #{tpu_custom_call.1} parent=55 // pred_check
          %p524 = pneg %p180
        $region58: #{tpu_custom_call.1} parent=55 // pred_check_branch
          %526 = sbr.rel (%p524) target = $region60
        $region59: #{tpu_custom_call.1} parent=55 // pred_region
          %s527 = sand.u32 %s165, 1
          %s528 = scalar_lea.sflag [#allocation4], %s527
          %s529 = sand.u32 %s165, 1
          %s530 = smul.addr %s529, 8
          %s531 = scalar_lea.vmem [#allocation3], %s530
          %532 = dma.done %s528, 128
        $region60: #{tpu_custom_call.1} parent=55 // pred_fallthru
          _
      $region56: #{tpu_custom_call.1} parent=5 // pred_fallthru
        _
    $region6: #{tpu_custom_call.1} parent=1 // loop_footer
      %s18 = sadd.s32 1, %s14
    $region7: #{tpu_custom_call.1} parent=1 // loop_footer_branch
      %13 = sbr.rel target = $region3
    $region8: #{tpu_custom_call.1} parent=1 // loop_exit
      _
    %533 = vsyncpa [#allocation4], 1
    %s534 = scalar_lea.sflag [#allocation4], 1
    %535 = vsyncpa %s534, 1

</llo_original>
